<compile_context>
chip_gen: v5e
topology: v5e:2x2
jax: 0.10.0
libtpu: 0.0.40
codegen_flags: <defaults>
</compile_context>

<pallas_src>
import functools

import jax
import jax.numpy as jnp
from jax.experimental import pallas as pl
from jax.experimental.pallas import tpu as pltpu

_LANE = 128            # vreg lane width
_SUBLANE = 8           # f32 sublane count
_MAX_TN = 512          # N-tile cap (multiple of 256 -> fills v6e/v7x MXU columns)
_DEFAULT_BLOCK_M = 1024


def _round_up(x, m):
    return (x + m - 1) // m * m


def _cdiv(a, b):
    return (a + b - 1) // b


def _vmem_budget_bytes():
    """Usable scoped-VMEM budget for this kernel (generation-aware)."""
    try:
        cap = int(pltpu.get_tpu_info().vmem_capacity_bytes)
    except Exception:
        cap = 64 << 20  # conservative fallback: v7x per-TensorCore VMEM
    # Leave max(cap/8, 8 MiB) headroom for compiler-internal scratch:
    # ~56 MiB usable on v7x (64 MiB), ~112 MiB on v5e/v6e (128 MiB).
    return cap - max(cap // 8, 8 << 20)


def _linear_kernel(x_ref, w_ref, b_ref, o_ref):
    # y_tile = x_tile @ W_tile + bias_tile.
    # MXU matmul with f32 accumulation; the bias broadcast-add rides the VPU
    # slot, which is free filler under the MXU / DMA.
    acc = jnp.dot(x_ref[...], w_ref[...], preferred_element_type=jnp.float32)
    o_ref[...] = (acc + b_ref[...]).astype(o_ref.dtype)


def prepare_params(w, b, *, param_dtype=jnp.float32):
    """One-time parameter prep (run once at setup, NOT per forward call).

    w : (D_out, D_in) nn.Linear weight
    b : (D_out,)      nn.Linear bias

    Returns (w_t_p, bias_p): transposed weight with D_out zero-padded to a
    lane multiple (so the kernel's output stores are lane-dense / unmasked)
    and the matching padded bias row.  Doing this once removes a full HBM
    read+write of W from every forward.  `param_dtype=jnp.bfloat16` enables
    bf16 streaming (f32 accumulate is kept inside the kernel); note this
    deviates from nn.Linear f32 numerics at the bf16 quantization level.
    """
    d_out, _ = w.shape
    d_out_p = _round_up(d_out, _LANE)
    w_t_p = jnp.pad(jnp.transpose(w), ((0, 0), (0, d_out_p - d_out)))
    bias_p = jnp.pad(b, (0, d_out_p - d_out)).reshape(1, d_out_p)
    return w_t_p.astype(param_dtype), bias_p.astype(jnp.float32)


@functools.partial(jax.jit, static_argnames=("d_out", "block_m"))
def dummy_encoder_forward(x, w_t_p, bias_p, *, d_out, block_m=_DEFAULT_BLOCK_M):
    """y = x @ W^T + b (DummyEncoder.forward) via a Pallas TPU kernel.

    x      : (B, D_in)        float32 (cast to w_t_p.dtype for streaming)
    w_t_p  : (D_in, D_out_p)  prepared by prepare_params (D_out_p % 128 == 0)
    bias_p : (1, D_out_p)     float32, prepared by prepare_params
    d_out  : true (unpadded) output width, static
    """
    B, D_in = x.shape
    d_out_p = w_t_p.shape[1]
    x = x.astype(w_t_p.dtype)                      # bf16 streaming if prepared so
    itemsize = jnp.dtype(w_t_p.dtype).itemsize

    # ---- N tile: multiple of 128 that divides d_out_p, capped at _MAX_TN. ----
    if d_out_p <= _MAX_TN:
        tn = d_out_p
    else:
        tn = _MAX_TN
        while d_out_p % tn:
            tn -= _LANE                            # 128 always divides d_out_p
    nt = d_out_p // tn
    resident = nt == 1                             # W/bias constant over the grid

    # ---- VMEM footprint (conservative, bytes). ------------------------------
    # x/out tiles are double-buffered by the pipeline; resident W/bias are
    # forced single-buffered below, otherwise counted 2x.
    budget = _vmem_budget_bytes()
    w_bufs = 1 if resident else 2
    w_tile_bytes = _round_up(D_in, _SUBLANE) * tn * itemsize
    bias_tile_bytes = _SUBLANE * tn * 4
    fixed = w_bufs * (w_tile_bytes + bias_tile_bytes)
    d_in_vmem = _round_up(D_in, _LANE)             # lane rounding inside VMEM
    per_row = 2 * d_in_vmem * itemsize + 2 * tn * 4   # dbl-buffered x row + out row

    # ---- Batch tile: balanced tiles, >=2 tiles when B > 8 (v7x megacore). ----
    B8 = _round_up(B, _SUBLANE)
    n_m_tiles = 1 if B8 <= _SUBLANE else max(_cdiv(B8, block_m), 2)
    tm = min(block_m, _round_up(_cdiv(B8, n_m_tiles), _SUBLANE))
    # Shrink the batch tile (never clamp the VMEM limit below need) to fit.
    while tm > _SUBLANE and fixed + tm * per_row > budget:
        tm = max(_SUBLANE, _round_up(tm // 2, _SUBLANE))

    b_p = _round_up(B8, tm)
    mt = b_p // tm
    vmem_need = fixed + tm * per_row
    vmem_limit = max(vmem_need + (2 << 20), 16 << 20)

    # Pad the batch only when needed; the contraction axis stays at its true
    # width (no per-call D_in padding, no 4x wasted x bandwidth).
    x_p = jnp.pad(x, ((0, b_p - B), (0, 0))) if b_p != B else x

    # ---- BlockSpecs. ---------------------------------------------------------
    x_spec = pl.BlockSpec((tm, D_in), lambda i, j: (i, 0))
    if resident:
        # Single-buffer the grid-invariant weight/bias: halves their VMEM cost.
        w_spec = pl.BlockSpec((D_in, tn), lambda i, j: (0, j),
                              pipeline_mode=pl.Buffered(1))
        b_spec = pl.BlockSpec((1, tn), lambda i, j: (0, j),
                              pipeline_mode=pl.Buffered(1))
    else:
        w_spec = pl.BlockSpec((D_in, tn), lambda i, j: (0, j))
        b_spec = pl.BlockSpec((1, tn), lambda i, j: (0, j))
    out_spec = pl.BlockSpec((tm, tn), lambda i, j: (i, j))

    cost = pl.CostEstimate(
        flops=2 * b_p * D_in * d_out_p,
        transcendentals=0,
        bytes_accessed=(b_p * D_in * itemsize        # x
                        + D_in * d_out_p * itemsize  # W (resident: read ~once)
                        + d_out_p * 4                # bias
                        + b_p * d_out_p * 4),        # out
    )

    y_p = pl.pallas_call(
        _linear_kernel,
        out_shape=jax.ShapeDtypeStruct((b_p, d_out_p), jnp.float32),
        grid_spec=pl.GridSpec(
            grid=(mt, nt),
            in_specs=[x_spec, w_spec, b_spec],
            out_specs=out_spec,
        ),
        compiler_params=pltpu.CompilerParams(
            # Output tiles are independent -> shard across TCs on v7x.
            dimension_semantics=("parallel", "parallel"),
            vmem_limit_bytes=vmem_limit,
        ),
        cost_estimate=cost,
    )(x_p, w_t_p, bias_p)

    # Trim only when the shapes require it; when (B, d_out) are already
    # (8,128)-aligned this is a zero-cost no-op.  Downstream-fusing callers
    # can take the padded slab (y_p) directly instead.
    if b_p == B and d_out_p == d_out:
        return y_p
    return y_p[:B, :d_out]


if __name__ == "__main__":
    # Small shapes consistent with the module: input_dim=32, latent_dim=16
    # -> fc = nn.Linear(32, 32); batch = 8.
    batch, input_dim, latent_dim = 8, 32, 16
    out_dim = latent_dim * 2

    key = jax.random.PRNGKey(0)
    kx, kw, kb = jax.random.split(key, 3)

    x = jax.random.normal(kx, (batch, input_dim), dtype=jnp.float32)
    # Deterministic PyTorch-style init (uniform, bound 1/sqrt(fan_in)).
    bound = 1.0 / jnp.sqrt(jnp.float32(input_dim))
    w = jax.random.uniform(kw, (out_dim, input_dim), jnp.float32, -bound, bound)
    b = jax.random.uniform(kb, (out_dim,), jnp.float32, -bound, bound)

    y_ref = x @ w.T + b

    # f32 path (matches nn.Linear numerics).
    w_t_p, bias_p = prepare_params(w, b)                      # one-time setup
    y = dummy_encoder_forward(x, w_t_p, bias_p, d_out=out_dim)
    jax.block_until_ready(y)
    assert y.shape == (batch, out_dim)
    assert jnp.allclose(y, y_ref, atol=1e-5, rtol=1e-5)

    # bf16-streaming path (f32 accumulate + f32 bias): ~2x HBM / ~4x MXU,
    # numerics deviate from f32 nn.Linear at bf16 quantization level.
    w_t_bf, bias_bf = prepare_params(w, b, param_dtype=jnp.bfloat16)
    y_bf = dummy_encoder_forward(x, w_t_bf, bias_bf, d_out=out_dim)
    jax.block_until_ready(y_bf)
    assert jnp.allclose(y_bf, y_ref, atol=5e-2, rtol=5e-2)

    print("KERNEL_OK")
</pallas_src>

<mosaic_0001>
module attributes {stable_mosaic.version = 11 : i64} {
  func.func @_linear_kernel(%arg0: i32, %arg1: i32, %arg2: memref<8x32xf32, #tpu.memory_space<vmem>>, %arg3: memref<32x128xf32, #tpu.memory_space<vmem>>, %arg4: memref<1x128xf32, #tpu.memory_space<vmem>>, %arg5: memref<8x128xf32, #tpu.memory_space<vmem>>) attributes {dimension_semantics = [#tpu.dimension_semantics<parallel>, #tpu.dimension_semantics<parallel>], iteration_bounds = array<i64: 1, 1>, scalar_prefetch = 0 : i64, scratch_operands = 0 : i64, tpu.core_type = #tpu.core_type<tc>, window_params = [{transform_indices = @transform_0, window_bounds = array<i64: 8, 32>}, {pipeline_mode = #tpu.pipeline_mode<synchronous>, transform_indices = @transform_1, window_bounds = array<i64: 32, 128>}, {pipeline_mode = #tpu.pipeline_mode<synchronous>, transform_indices = @transform_2, window_bounds = array<i64: 1, 128>}, {transform_indices = @transform_3, window_bounds = array<i64: 8, 128>}]} {
    %c0 = arith.constant 0 : index
    %c0_0 = arith.constant 0 : index
    %0 = vector.load %arg2[%c0, %c0_0] : memref<8x32xf32, #tpu.memory_space<vmem>>, vector<8x32xf32>
    %c0_1 = arith.constant 0 : index
    %c0_2 = arith.constant 0 : index
    %1 = vector.load %arg3[%c0_1, %c0_2] : memref<32x128xf32, #tpu.memory_space<vmem>>, vector<32x128xf32>
    %cst = arith.constant dense<0.000000e+00> : vector<8x128xf32>
    %2 = tpu.matmul %0, %1, %cst {dimension_numbers = #tpu.dot_dimension_numbers<[1], [0], [0], [1], [0, 0, 1, 1], [], []>} : vector<8x32xf32>, vector<32x128xf32>, vector<8x128xf32> -> vector<8x128xf32>
    %c0_3 = arith.constant 0 : index
    %c0_4 = arith.constant 0 : index
    %3 = vector.load %arg4[%c0_3, %c0_4] : memref<1x128xf32, #tpu.memory_space<vmem>>, vector<1x128xf32>
    %4 = vector.broadcast %3 : vector<1x128xf32> to vector<8x128xf32>
    %5 = arith.addf %2, %4 : vector<8x128xf32>
    %c0_5 = arith.constant 0 : index
    %c0_6 = arith.constant 0 : index
    %6 = vector.load %arg5[%c0_5, %c0_6] : memref<8x128xf32, #tpu.memory_space<vmem>>, vector<8x128xf32>
    tpu.vector_store %arg5[%c0_5, %c0_6], %5 {strides = array<i32>} : memref<8x128xf32, #tpu.memory_space<vmem>>, vector<8x128xf32>,
    return
  }
  func.func @transform_0(%arg0: i32, %arg1: i32) -> (i32, i32) {
    %c0_i32 = arith.constant 0 : i32
    %c0_i32_0 = arith.constant 0 : i32
    return %arg0, %c0_i32 : i32, i32
  }
  func.func @transform_1(%arg0: i32, %arg1: i32) -> (i32, i32) {
    %c0_i32 = arith.constant 0 : i32
    %c0_i32_0 = arith.constant 0 : i32
    return %c0_i32, %arg1 : i32, i32
  }
  func.func @transform_2(%arg0: i32, %arg1: i32) -> (i32, i32) {
    %c0_i32 = arith.constant 0 : i32
    %c0_i32_0 = arith.constant 0 : i32
    return %c0_i32, %arg1 : i32, i32
  }
  func.func @transform_3(%arg0: i32, %arg1: i32) -> (i32, i32) {
    %c0_i32 = arith.constant 0 : i32
    return %arg0, %arg1 : i32, i32
  }
}

</mosaic_0001>

<llo_original>
// kernel: dummy_encoder_forward.1
$region0: #{dummy_encoder_forward.1}
  #allocation0 [shape = 'u32[]', space=smem, size = 0x4, offset = 0x4, fixed_abs, tag = 'smem constant byte address 0x4 - core index']
  #allocation1 [shape = 'u32[72,128]{1,0:T(1,128)}', space=vmem, size = 0x9000, scoped, tag = 'internal scratch']
  %s0 = inlined_call_operand.hbm [shape: f32[8,32], index: 0, kind: input, shape index: {}]
  %s1 = inlined_call_operand.hbm [shape: f32[32,128], index: 1, kind: input, shape index: {}]
  %s2 = inlined_call_operand.vmem [shape: f32[1,128], index: 2, kind: input, shape index: {}]
  %s3 = inlined_call_operand.hbm [shape: f32[8,128], index: 3, kind: output, shape index: {}]
  %s4 = sld [smem:[#allocation0]]
  $region30: #{dummy_encoder_forward.1} parent=0
    _
  %s6 = ssub.s32 1, %s4
  %s7 = scalar_select 0, %s6, %s4
  $region1: #{dummy_encoder_forward.1} parent=0
    #allocation2 [shape = 'u8[4096]{0}', space=vmem, size = 0x1000, scoped, tag = 'input window, operand 0, single buffered']
    #allocation3 [shape = 's32[1]{0}', space=sflag, size = 0x4, scoped, tag = 'scoped memory for dummy_encoder_forward.1']
    #allocation4 [shape = 's32[1]{0}', space=sflag, size = 0x4, scoped, tag = 'scoped memory for dummy_encoder_forward.1']
    #allocation5 [shape = 'u8[16384]{0}', space=vmem, size = 0x4000, scoped, tag = 'input window, operand 1, single buffered']
    #allocation6 [shape = 's32[1]{0}', space=sflag, size = 0x4, scoped, tag = 'scoped memory for dummy_encoder_forward.1']
    #allocation7 [shape = 'u8[4096]{0}', space=vmem, size = 0x1000, scoped, tag = 'output window, operand 0, single buffered']
    %8 = vsyncpa [#allocation3], 0
    %9 = vsyncpa [#allocation6], 0
    %10 = vsyncpa [#allocation4], 0
    // Predicated region
    $region2: #{dummy_encoder_forward.1} parent=1 // pred_check
      _
    $region3: #{dummy_encoder_forward.1} parent=1 // pred_check_branch
      %12 = sbr.rel (0) target = $region5
    $region4: #{dummy_encoder_forward.1} parent=1 // pred_region
      %14 = vsyncadd [#allocation3], 0
      %s16 = sshll.u32 %s0, 4
      %s17 = int_to_ptr.hbm [resolvable:$true] %s16
      %s18 = sshll.u32 [#allocation2], 4
      %s19 = int_to_ptr.vmem [resolvable:$true] %s18
      %21 = dma.hbm_to_vmem [thread:$0]  %s17, 128, %s19, [#allocation3]
    $region5: #{dummy_encoder_forward.1} parent=1 // pred_fallthru
      _
    // Predicated region
    $region6: #{dummy_encoder_forward.1} parent=1 // pred_check
      _
    $region7: #{dummy_encoder_forward.1} parent=1 // pred_check_branch
      %23 = sbr.rel (0) target = $region9
    $region8: #{dummy_encoder_forward.1} parent=1 // pred_region
      %25 = vsyncadd [#allocation6], 0
      %s26 = sshll.u32 %s1, 4
      %s27 = int_to_ptr.hbm [resolvable:$true] %s26
      %s28 = sshll.u32 [#allocation5], 4
      %s29 = int_to_ptr.vmem [resolvable:$true] %s28
      %34 = dma.hbm_to_vmem [thread:$0]  %s27, 512, %s29, [#allocation6], 128, 128, 8
    $region9: #{dummy_encoder_forward.1} parent=1 // pred_fallthru
      _
    // Predicated region
    $region10: #{dummy_encoder_forward.1} parent=1 // pred_check
      _
    $region11: #{dummy_encoder_forward.1} parent=1 // pred_check_branch
      %36 = sbr.rel (0) target = $region13
    $region12: #{dummy_encoder_forward.1} parent=1 // pred_region
      _
    $region13: #{dummy_encoder_forward.1} parent=1 // pred_fallthru
      _
    // Predicated region
    $region14: #{dummy_encoder_forward.1} parent=1 // pred_check
      _
    $region15: #{dummy_encoder_forward.1} parent=1 // pred_check_branch
      %38 = sbr.rel (0) target = $region17
    $region16: #{dummy_encoder_forward.1} parent=1 // pred_region
      %40 = dma.done [#allocation3], 128
    $region17: #{dummy_encoder_forward.1} parent=1 // pred_fallthru
      _
    // Predicated region
    $region18: #{dummy_encoder_forward.1} parent=1 // pred_check
      _
    $region19: #{dummy_encoder_forward.1} parent=1 // pred_check_branch
      %42 = sbr.rel (0) target = $region21
    $region20: #{dummy_encoder_forward.1} parent=1 // pred_region
      %44 = dma.done [#allocation6], 512
    $region21: #{dummy_encoder_forward.1} parent=1 // pred_fallthru
      _
    %v45 = vld [vmem:[#allocation2] sm:$0xff]
    %v46 = vld [vmem:[#allocation5] sm:$0xff]
    %v47 = vld [vmem:[#allocation5 + $0x8] sm:$0xff]
    %v48 = vld [vmem:[#allocation5 + $0x10] sm:$0xff]
    %v49 = vld [vmem:[#allocation5 + $0x18] sm:$0xff]
    %v50 = vld [vmem:[%s2] sm:$0x1]
    %v52 = vperm.slane %v50, 0
    %vm54 = vcmask 261120
    %v56 = vsel %vm54, %v45, 0
    %58 = vmatpush.msra.mxu0 0.0
    %59 = vmatpush.msra.mxu0 0.0
    %60 = vmatpush.msra.mxu0 0.0
    %61 = vmatpush.msra.mxu0 0.0
    %62 = vmatpush.msra.mxu0 0.0
    %63 = vmatpush.msra.mxu0 0.0
    %64 = vmatpush.msra.mxu0 0.0
    %65 = vmatpush.msra.mxu0 0.0
    %66 = vmatpush.msra.mxu0 0.0
    %67 = vmatpush.msra.mxu0 0.0
    %68 = vmatpush.msra.mxu0 0.0
    %69 = vmatpush.msra.mxu0 0.0
    %70 = vmatpush.msra.mxu0 %v49
    %71 = vmatpush.msra.mxu0 %v48
    %72 = vmatpush.msra.mxu0 %v47
    %73 = vmatpush.msra.mxu0 %v46
    %74 = vmatmul.f32.gmra.mxu0 %v56
    %v75 = vpop.f32.mrf.mxu0
    %v76 = vadd.f32 %v52, %v75
    %77 = vdwg.mxu0
    %78 = vst [vmem:[#allocation7] sm:$0xff] %v76
    // Predicated region
    $region22: #{dummy_encoder_forward.1} parent=1 // pred_check
      _
    $region23: #{dummy_encoder_forward.1} parent=1 // pred_check_branch
      %80 = sbr.rel (0) target = $region25
    $region24: #{dummy_encoder_forward.1} parent=1 // pred_region
      %82 = vsyncadd [#allocation4], 0
      %s84 = sshll.u32 [#allocation7], 4
      %s85 = int_to_ptr.vmem [resolvable:$true] %s84
      %s86 = sshll.u32 %s3, 4
      %s87 = int_to_ptr.hbm [resolvable:$true] %s86
      %89 = dma.vmem_to_hbm [thread:$0]  %s85, 128, %s87, [#allocation4]
    $region25: #{dummy_encoder_forward.1} parent=1 // pred_fallthru
      _
    // Predicated region
    $region26: #{dummy_encoder_forward.1} parent=1 // pred_check
      _
    $region27: #{dummy_encoder_forward.1} parent=1 // pred_check_branch
      %91 = sbr.rel (0) target = $region29
    $region28: #{dummy_encoder_forward.1} parent=1 // pred_region
      %93 = dma.done [#allocation4], 128
    $region29: #{dummy_encoder_forward.1} parent=1 // pred_fallthru
      _
    %94 = vsyncpa [#allocation3], 1
    %95 = vsyncpa [#allocation6], 1
    %96 = vsyncpa [#allocation4], 1

</llo_original>
